<compile_context>
chip_gen: v5e
topology: v5e:2x2
jax: 0.10.0
libtpu: 0.0.40
codegen_flags: <defaults>
</compile_context>

<pallas_src>
import functools
import math

import jax
import jax.numpy as jnp
from jax import lax
from jax.experimental import pallas as pl
from jax.experimental.pallas import tpu as pltpu


def _round_up(x: int, m: int) -> int:
    return ((x + m - 1) // m) * m


def _cdiv(a: int, b: int) -> int:
    return (a + b - 1) // b


@functools.lru_cache(maxsize=None)
def _vmem_limit_bytes() -> int:
    """Scoped-VMEM limit: ~3/4 of physical VMEM (v5e/v6e 128 MiB, v7x 64 MiB)."""
    try:
        cap = int(pltpu.get_tpu_info().vmem_capacity_bytes)
    except Exception:
        cap = 64 << 20  # conservative fallback (v7x per-TC physical VMEM)
    return min(cap * 3 // 4, 110 << 20)


def _pick_tiles(m, k, n, x_isize, w_isize, out_isize, budget, k_tile_cap):
    """Return (tm, tn, tk, split_k) sized toward machine balance, VMEM-capped."""
    m_align = 16 if w_isize <= 2 else 8

    # 128-MiB-VMEM parts (v5e/v6e) -> 1024-class tiles; v7x (64 MiB) -> 512.
    big = 1024 if budget >= (72 << 20) else 512
    tm = big if m >= big else _round_up(m, m_align)
    tn = big if n >= big else _round_up(n, 128)

    # Keep >=2 (i, j) blocks when possible so both TensorCores of a dual-TC
    # part get work (harmless on single-TC generations).
    if m >= 256 and _cdiv(m, tm) * _cdiv(n, tn) < 2:
        tm = _round_up(_cdiv(m, 2), m_align)

    def live(tm_, tn_, tk_, acc):
        b = 2 * tm_ * tk_ * x_isize       # x double-buffer (fed in orig dtype)
        b += 2 * tn_ * tk_ * w_isize      # W double-buffer (compute dtype)
        b += 2 * tn_ * 4                  # bias double-buffer (f32)
        b += 2 * tm_ * tn_ * out_isize    # output double-buffer
        if acc:
            b += tm_ * tn_ * 4            # f32 accumulator scratch
        return b

    # Preferred: whole K in one tile -> no reduction grid axis, no accumulator
    # read-modify-write (the vst slot is 1-wide on v5e), no epilogue copy.
    if k_tile_cap is None and live(tm, tn, k, False) <= budget:
        return tm, tn, k, False

    # Otherwise split K with a large tk (acc RMW traffic & step count ~ 1/tk).
    tk = min(k_tile_cap if k_tile_cap is not None else 2048, _round_up(k, 128))
    tk = max(128, (tk // 128) * 128)
    while live(tm, tn, tk, True) > budget and tk > 128:
        tk = max(128, tk // 2)
    while live(tm, tn, tk, True) > budget and (tm > 2 * m_align or tn > 128):
        if tm >= tn and tm > 2 * m_align:
            tm = _round_up(max(m_align, tm // 2), m_align)
        elif tn > 128:
            tn = _round_up(max(128, tn // 2), 128)
        else:
            break
    return tm, tn, tk, True


# ----------------------------- kernel bodies --------------------------------

def _linear_kernel_fused_k(x_ref, w_ref, b_ref, o_ref, *, compute_dtype):
    """Whole reduction dim resident in VMEM: one dot + bias per (i, j) tile."""
    x = x_ref[...].astype(compute_dtype)
    w = w_ref[...].astype(compute_dtype)          # W in PyTorch (out, in) layout
    acc = lax.dot_general(
        x, w,
        dimension_numbers=(((1,), (1,)), ((), ())),   # x @ W^T on the MXU
        preferred_element_type=jnp.float32,
    )
    # Idomp activation == identity.
    o_ref[...] = (acc + b_ref[...]).astype(o_ref.dtype)


def _linear_kernel_split_k_f32out(x_ref, w_ref, b_ref, o_ref, *, compute_dtype):
    """Split-K, f32 output: accumulate directly into the resident output block."""
    k = pl.program_id(2)

    @pl.when(k == 0)
    def _init():
        o_ref[...] = jnp.zeros_like(o_ref)

    o_ref[...] += lax.dot_general(
        x_ref[...].astype(compute_dtype), w_ref[...].astype(compute_dtype),
        dimension_numbers=(((1,), (1,)), ((), ())),
        preferred_element_type=jnp.float32,
    )

    @pl.when(k == pl.num_programs(2) - 1)
    def _finalize():
        o_ref[...] = o_ref[...] + b_ref[...]


def _linear_kernel_split_k_acc(x_ref, w_ref, b_ref, o_ref, acc_ref, *, compute_dtype):
    """Split-K with a separate f32 accumulator (non-f32 output dtypes)."""
    k = pl.program_id(2)

    @pl.when(k == 0)
    def _init():
        acc_ref[...] = jnp.zeros_like(acc_ref)

    acc_ref[...] += lax.dot_general(
        x_ref[...].astype(compute_dtype), w_ref[...].astype(compute_dtype),
        dimension_numbers=(((1,), (1,)), ((), ())),
        preferred_element_type=jnp.float32,
    )

    @pl.when(k == pl.num_programs(2) - 1)
    def _finalize():
        o_ref[...] = (acc_ref[...] + b_ref[...]).astype(o_ref.dtype)


# ------------------------------- wrapper -------------------------------------

def prepare_linear_params(weight, bias, compute_dtype=jnp.bfloat16):
    """One-time parameter prep (do this at load time, NOT per call):
    cast W to the MXU operand dtype, bias to f32."""
    return weight.astype(compute_dtype), bias.astype(jnp.float32)


@functools.partial(jax.jit, static_argnames=("compute_dtype", "k_tile_cap"))
def linear_with_activation(x, weight, bias, *, compute_dtype=jnp.bfloat16,
                           k_tile_cap=None):
    """y = activation(x @ weight.T + bias), activation = identity (Idomp).

    x:       (..., in_dim)
    weight:  (out_dim, in_dim)  -- PyTorch nn.Linear convention (never transposed)
    bias:    (out_dim,)
    compute_dtype: MXU operand dtype (default bf16); accumulation is f32.
    k_tile_cap: optional cap on the K tile (mainly to force the split-K path).
    """
    orig_dtype = x.dtype
    in_dim = x.shape[-1]
    out_dim, w_in = weight.shape
    assert w_in == in_dim, "weight must be (out_dim, in_dim)"
    lead = x.shape[:-1]
    m = math.prod(lead) if lead else 1

    x2d = x.reshape(m, in_dim)
    # No-op when the caller already prepared params with prepare_linear_params().
    w = weight if weight.dtype == jnp.dtype(compute_dtype) else weight.astype(compute_dtype)
    b2d = bias.reshape(1, out_dim).astype(jnp.float32)

    vmem_limit = _vmem_limit_bytes()
    budget = int(vmem_limit * 0.85)
    out_isize = jnp.dtype(orig_dtype).itemsize
    tm, tn, tk, split_k = _pick_tiles(
        m, in_dim, out_dim,
        x2d.dtype.itemsize, w.dtype.itemsize, out_isize, budget, k_tile_cap)

    # Grid-aligned output; garbage rows/cols from partial M/N input blocks land
    # only past (m, out_dim) and are sliced off below.
    mo = _cdiv(m, tm) * tm
    no = _cdiv(out_dim, tn) * tn

    cost = pl.CostEstimate(
        flops=2 * m * out_dim * in_dim,
        transcendentals=0,
        bytes_accessed=(m * in_dim * x2d.dtype.itemsize
                        + out_dim * in_dim * w.dtype.itemsize
                        + out_dim * 4
                        + m * out_dim * out_isize),
    )
    cparams = pltpu.CompilerParams(
        dimension_semantics=(("parallel", "parallel", "arbitrary") if split_k
                             else ("parallel", "parallel")),
        vmem_limit_bytes=vmem_limit,
    )

    if not split_k:
        grid = (mo // tm, no // tn)
        kernel = functools.partial(_linear_kernel_fused_k, compute_dtype=compute_dtype)
        out = pl.pallas_call(
            kernel,
            out_shape=jax.ShapeDtypeStruct((mo, no), orig_dtype),
            grid_spec=pltpu.PrefetchScalarGridSpec(
                num_scalar_prefetch=0,
                grid=grid,
                in_specs=[
                    pl.BlockSpec((tm, in_dim), lambda i, j: (i, 0)),  # x strip
                    pl.BlockSpec((tn, in_dim), lambda i, j: (j, 0)),  # W strip (out,in)
                    pl.BlockSpec((1, tn), lambda i, j: (0, j)),       # bias
                ],
                out_specs=pl.BlockSpec((tm, tn), lambda i, j: (i, j)),
            ),
            compiler_params=cparams,
            cost_estimate=cost,
        )(x2d, w, b2d)
    else:
        kp = _round_up(in_dim, tk)
        # Only K ever needs real zero padding: OOB garbage along the reduction
        # axis would corrupt valid outputs.  (Rare corner case in practice.)
        if kp != in_dim:
            x2d = jnp.pad(x2d, ((0, 0), (0, kp - in_dim)))
            w = jnp.pad(w, ((0, 0), (0, kp - in_dim)))
        grid = (mo // tm, no // tn, kp // tk)
        if jnp.dtype(orig_dtype) == jnp.float32:
            kernel = functools.partial(_linear_kernel_split_k_f32out,
                                       compute_dtype=compute_dtype)
            scratch = []
        else:
            kernel = functools.partial(_linear_kernel_split_k_acc,
                                       compute_dtype=compute_dtype)
            scratch = [pltpu.VMEM((tm, tn), jnp.float32)]
        out = pl.pallas_call(
            kernel,
            out_shape=jax.ShapeDtypeStruct((mo, no), orig_dtype),
            grid_spec=pltpu.PrefetchScalarGridSpec(
                num_scalar_prefetch=0,
                grid=grid,
                in_specs=[
                    pl.BlockSpec((tm, tk), lambda i, j, k: (i, k)),  # x tile
                    pl.BlockSpec((tn, tk), lambda i, j, k: (j, k)),  # W tile (out,in)
                    pl.BlockSpec((1, tn), lambda i, j, k: (0, j)),   # bias tile
                ],
                out_specs=pl.BlockSpec((tm, tn), lambda i, j, k: (i, j)),
                scratch_shapes=scratch,
            ),
            compiler_params=cparams,
            cost_estimate=cost,
        )(x2d, w, b2d)

    if (mo, no) != (m, out_dim):
        out = out[:m, :out_dim]
    return out.reshape(*lead, out_dim)


def init_linear_params(key, in_dim, out_dim, w_init_gain="linear"):
    """Replicates xavier_uniform_(weight, gain) + PyTorch default bias init."""
    kw, kb = jax.random.split(key)
    gain = 1.0  # calculate_gain('linear') == 1.0
    a = gain * (6.0 / (in_dim + out_dim)) ** 0.5
    weight = jax.random.uniform(kw, (out_dim, in_dim), jnp.float32, -a, a)
    bound = 1.0 / (in_dim ** 0.5)
    bias = jax.random.uniform(kb, (out_dim,), jnp.float32, -bound, bound)
    return weight, bias


if __name__ == "__main__":
    key = jax.random.PRNGKey(0)
    k_x, k_p, k_x2, k_p2 = jax.random.split(key, 4)

    # --- 1. module-scale check: default bf16 operands, fused-K path ---------
    B, S, IN_DIM, OUT_DIM = 2, 8, 32, 64
    x = jax.random.normal(k_x, (B, S, IN_DIM), dtype=jnp.float32)
    weight, bias = init_linear_params(k_p, IN_DIM, OUT_DIM)
    w_prep, b_prep = prepare_linear_params(weight, bias)  # one-time param prep

    y = jax.block_until_ready(linear_with_activation(x, w_prep, b_prep))
    y_ref = (x.astype(jnp.bfloat16).astype(jnp.float32)
             @ w_prep.astype(jnp.float32).T) + bias
    assert y.shape == (B, S, OUT_DIM)
    assert jnp.allclose(y, y_ref, atol=3e-2, rtol=3e-2)

    # --- 2. larger check: fused-K path with f32 operands ---------------------
    B2, S2, IN2, OUT2 = 2, 128, 512, 256
    x2 = jax.random.normal(k_x2, (B2, S2, IN2), dtype=jnp.float32)
    w2, b2 = init_linear_params(k_p2, IN2, OUT2)
    y2 = jax.block_until_ready(
        linear_with_activation(x2, w2, b2, compute_dtype=jnp.float32))
    y2_ref = x2 @ w2.T + b2
    assert y2.shape == (B2, S2, OUT2)
    assert jnp.allclose(y2, y2_ref, atol=2e-2, rtol=2e-2)

    # --- 3. forced split-K path, bf16 operands, f32 out (direct accumulate) --
    w2p, b2p = prepare_linear_params(w2, b2)
    y3 = jax.block_until_ready(
        linear_with_activation(x2, w2p, b2p, k_tile_cap=256))
    y3_ref = (x2.astype(jnp.bfloat16).astype(jnp.float32)
              @ w2p.astype(jnp.float32).T) + b2
    assert jnp.allclose(y3, y3_ref, atol=3e-2, rtol=3e-2)

    # --- 4. forced split-K path, bf16 output (scratch-accumulator kernel) ----
    y4 = jax.block_until_ready(
        linear_with_activation(x2.astype(jnp.bfloat16), w2p, b2p, k_tile_cap=256))
    assert y4.dtype == jnp.bfloat16
    assert jnp.allclose(y4.astype(jnp.float32), y3_ref, atol=5e-2, rtol=5e-2)

    print("KERNEL_OK")
</pallas_src>

<mosaic_0001>
module attributes {stable_mosaic.version = 11 : i64} {
  func.func @_linear_kernel_fused_k(%arg0: i32, %arg1: i32, %arg2: memref<16x32xf32, #tpu.memory_space<vmem>>, %arg3: memref<128x32xbf16, #tpu.memory_space<vmem>>, %arg4: memref<1x128xf32, #tpu.memory_space<vmem>>, %arg5: memref<16x128xf32, #tpu.memory_space<vmem>>) attributes {dimension_semantics = [#tpu.dimension_semantics<parallel>, #tpu.dimension_semantics<parallel>], iteration_bounds = array<i64: 1, 1>, scalar_prefetch = 0 : i64, scratch_operands = 0 : i64, tpu.core_type = #tpu.core_type<tc>, window_params = [{transform_indices = @transform_0, window_bounds = array<i64: 16, 32>}, {transform_indices = @transform_1, window_bounds = array<i64: 128, 32>}, {transform_indices = @transform_2, window_bounds = array<i64: 1, 128>}, {transform_indices = @transform_3, window_bounds = array<i64: 16, 128>}]} {
    %c0 = arith.constant 0 : index
    %c0_0 = arith.constant 0 : index
    %0 = vector.load %arg2[%c0, %c0_0] : memref<16x32xf32, #tpu.memory_space<vmem>>, vector<16x32xf32>
    %1 = arith.truncf %0 : vector<16x32xf32> to vector<16x32xbf16>
    %c0_1 = arith.constant 0 : index
    %c0_2 = arith.constant 0 : index
    %2 = vector.load %arg3[%c0_1, %c0_2] : memref<128x32xbf16, #tpu.memory_space<vmem>>, vector<128x32xbf16>
    %cst = arith.constant dense<0.000000e+00> : vector<16x128xf32>
    %3 = tpu.matmul %1, %2, %cst {dimension_numbers = #tpu.dot_dimension_numbers<[1], [1], [0], [0], [0, 0, 1, 0], [], []>} : vector<16x32xbf16>, vector<128x32xbf16>, vector<16x128xf32> -> vector<16x128xf32>
    %c0_3 = arith.constant 0 : index
    %c0_4 = arith.constant 0 : index
    %4 = vector.load %arg4[%c0_3, %c0_4] : memref<1x128xf32, #tpu.memory_space<vmem>>, vector<1x128xf32>
    %5 = vector.broadcast %4 : vector<1x128xf32> to vector<16x128xf32>
    %6 = arith.addf %3, %5 : vector<16x128xf32>
    %c0_5 = arith.constant 0 : index
    %c0_6 = arith.constant 0 : index
    %7 = vector.load %arg5[%c0_5, %c0_6] : memref<16x128xf32, #tpu.memory_space<vmem>>, vector<16x128xf32>
    tpu.vector_store %arg5[%c0_5, %c0_6], %6 {strides = array<i32>} : memref<16x128xf32, #tpu.memory_space<vmem>>, vector<16x128xf32>,
    return
  }
  func.func @transform_0(%arg0: i32, %arg1: i32) -> (i32, i32) {
    %c0_i32 = arith.constant 0 : i32
    %c0_i32_0 = arith.constant 0 : i32
    return %arg0, %c0_i32 : i32, i32
  }
  func.func @transform_1(%arg0: i32, %arg1: i32) -> (i32, i32) {
    %c0_i32 = arith.constant 0 : i32
    %c0_i32_0 = arith.constant 0 : i32
    return %arg1, %c0_i32 : i32, i32
  }
  func.func @transform_2(%arg0: i32, %arg1: i32) -> (i32, i32) {
    %c0_i32 = arith.constant 0 : i32
    %c0_i32_0 = arith.constant 0 : i32
    return %c0_i32, %arg1 : i32, i32
  }
  func.func @transform_3(%arg0: i32, %arg1: i32) -> (i32, i32) {
    %c0_i32 = arith.constant 0 : i32
    return %arg0, %arg1 : i32, i32
  }
}

</mosaic_0001>

<llo_original>
// kernel: linear_with_activation.1
$region0: #{linear_with_activation.1}
  #allocation0 [shape = 'u32[]', space=smem, size = 0x4, offset = 0x4, fixed_abs, tag = 'smem constant byte address 0x4 - core index']
  #allocation1 [shape = 'u32[72,128]{1,0:T(1,128)}', space=vmem, size = 0x9000, scoped, tag = 'internal scratch']
  %s0 = inlined_call_operand.vmem [shape: f32[16,32], index: 0, kind: input, shape index: {}]
  %s1 = inlined_call_operand.vmem [shape: bf16[64,32], index: 1, kind: input, shape index: {}]
  %s2 = inlined_call_operand.vmem [shape: f32[1,64], index: 2, kind: input, shape index: {}]
  %s3 = inlined_call_operand.vmem [shape: f32[16,128], index: 3, kind: output, shape index: {}]
  %s4 = sld [smem:[#allocation0]]
  $region22: #{linear_with_activation.1} parent=0
    _
  %s6 = ssub.s32 1, %s4
  %s7 = scalar_select 0, %s6, %s4
  // Predicated region
  $region2: #{linear_with_activation.1} parent=0 // pred_check
    _
  $region3: #{linear_with_activation.1} parent=0 // pred_check_branch
    %9 = sbr.rel (0) target = $region5
  $region4: #{linear_with_activation.1} parent=0 // pred_region
    _
  $region5: #{linear_with_activation.1} parent=0 // pred_fallthru
    _
  // Predicated region
  $region6: #{linear_with_activation.1} parent=0 // pred_check
    _
  $region7: #{linear_with_activation.1} parent=0 // pred_check_branch
    %11 = sbr.rel (0) target = $region9
  $region8: #{linear_with_activation.1} parent=0 // pred_region
    _
  $region9: #{linear_with_activation.1} parent=0 // pred_fallthru
    _
  // Predicated region
  $region10: #{linear_with_activation.1} parent=0 // pred_check
    _
  $region11: #{linear_with_activation.1} parent=0 // pred_check_branch
    %13 = sbr.rel (0) target = $region13
  $region12: #{linear_with_activation.1} parent=0 // pred_region
    _
  $region13: #{linear_with_activation.1} parent=0 // pred_fallthru
    _
  %v14 = vld [vmem:[%s0] sm:$0xff]
  %v15 = vld [vmem:[%s0 + $0x8] sm:$0xff]
  %v16 = vpack.c.bf16 %v15, %v14
  %v17 = vld [vmem:[%s1] sm:$0xf]
  %v18 = vld [vmem:[%s1 + $0x4] sm:$0xf]
  %v19 = vld [vmem:[%s1 + $0x8] sm:$0xf]
  %v20 = vld [vmem:[%s1 + $0xc] sm:$0xf]
  %v21 = vld [vmem:[%s1 + $0x10] sm:$0xf]
  %v22 = vld [vmem:[%s1 + $0x14] sm:$0xf]
  %v23 = vld [vmem:[%s1 + $0x18] sm:$0xf]
  %v24 = vld [vmem:[%s1 + $0x1c] sm:$0xf]
  %v25 = vld [vmem:[%s1 + $0x20] sm:$0xf]
  %v26 = vld [vmem:[%s1 + $0x24] sm:$0xf]
  %v27 = vld [vmem:[%s1 + $0x28] sm:$0xf]
  %v28 = vld [vmem:[%s1 + $0x2c] sm:$0xf]
  %v29 = vld [vmem:[%s1 + $0x30] sm:$0xf]
  %v30 = vld [vmem:[%s1 + $0x34] sm:$0xf]
  %v31 = vld [vmem:[%s1 + $0x38] sm:$0xf]
  %v32 = vld [vmem:[%s1 + $0x3c] sm:$0xf]
  %v33 = vld [vmem:[%s2] sm:$0x1]
  %v35 = vperm.slane %v33, 0
  %v53 = vunpack.c.l.b16 %v17
  %v54 = vunpack.c.l.b16 %v18
  %v55 = vunpack.c.l.b16 %v19
  %v56 = vunpack.c.l.b16 %v20
  %v57 = vunpack.c.l.b16 %v21
  %v58 = vunpack.c.l.b16 %v22
  %v59 = vunpack.c.l.b16 %v23
  %v60 = vunpack.c.l.b16 %v24
  %v61 = vunpack.c.l.b16 %v25
  %v62 = vunpack.c.l.b16 %v26
  %v63 = vunpack.c.l.b16 %v27
  %v64 = vunpack.c.l.b16 %v28
  %v65 = vunpack.c.l.b16 %v29
  %v66 = vunpack.c.l.b16 %v30
  %v67 = vunpack.c.l.b16 %v31
  %v68 = vunpack.c.l.b16 %v32
  %v69 = vpack.c.b16 %v54, %v53
  %v70 = vpack.c.b16 %v56, %v55
  %v71 = vpack.c.b16 %v58, %v57
  %v72 = vpack.c.b16 %v60, %v59
  %v73 = vpack.c.b16 %v62, %v61
  %v74 = vpack.c.b16 %v64, %v63
  %v75 = vpack.c.b16 %v66, %v65
  %v76 = vpack.c.b16 %v68, %v67
  %vm77 = vcmask 261120
  %v79 = vsel %vm77, %v16, 0
  %v82 = vsel %vm77, %v69, 0
  %v85 = vsel %vm77, %v70, 0
  %v88 = vsel %vm77, %v71, 0
  %v91 = vsel %vm77, %v72, 0
  %v94 = vsel %vm77, %v73, 0
  %v97 = vsel %vm77, %v74, 0
  %v100 = vsel %vm77, %v75, 0
  %v103 = vsel %vm77, %v76, 0
  %105 = vmatpush.bf16.xpose.msra.mxu0 %v103
  %106 = vmatpush.bf16.xpose.msra.mxu0 %v100
  %107 = vmatpush.bf16.xpose.msra.mxu0 %v97
  %108 = vmatpush.bf16.xpose.msra.mxu0 %v94
  %109 = vmatpush.bf16.xpose.msra.mxu0 %v91
  %110 = vmatpush.bf16.xpose.msra.mxu0 %v88
  %111 = vmatpush.bf16.xpose.msra.mxu0 %v85
  %112 = vmatpush.bf16.xpose.msra.mxu0 %v82
  %113 = vmatmul.bf16.gmra.mxu0 %v79
  %v114 = vpop.f32.mrf.mxu0
  %v115 = vadd.f32 %v35, %v114
  %v116 = vpop.f32.mrf.mxu0
  %v117 = vadd.f32 %v35, %v116
  %118 = vdwg.mxu0
  %119 = vst [vmem:[%s3] sm:$0xff] %v115
  %120 = vst [vmem:[%s3 + $0x8] sm:$0xff] %v117
  // Predicated region
  $region14: #{linear_with_activation.1} parent=0 // pred_check
    _
  $region15: #{linear_with_activation.1} parent=0 // pred_check_branch
    %122 = sbr.rel (0) target = $region17
  $region16: #{linear_with_activation.1} parent=0 // pred_region
    _
  $region17: #{linear_with_activation.1} parent=0 // pred_fallthru
    _
  // Predicated region
  $region18: #{linear_with_activation.1} parent=0 // pred_check
    _
  $region19: #{linear_with_activation.1} parent=0 // pred_check_branch
    %124 = sbr.rel (0) target = $region21
  $region20: #{linear_with_activation.1} parent=0 // pred_region
    _
  $region21: #{linear_with_activation.1} parent=0 // pred_fallthru
    _

</llo_original>
